<compile_context>
chip_gen: v7x
topology: tpu7x:2x2x1
jax: 0.10.0
libtpu: 0.0.40
codegen_flags: <defaults>
</compile_context>

<pallas_src>
import jax
import jax.numpy as jnp
from jax.experimental import pallas as pl
from jax.experimental.pallas import tpu as pltpu

BN_EPS = 1e-5


def _round_up(v, m):
    return (v + m - 1) // m * m


def projection_head_kernel(x_ref, w1_ref, gamma_ref, beta_ref, w2_ref, b2_ref,
                           o_ref, acc_ref):
    k = pl.program_id(1)

    @pl.when(k == 0)
    def _():
        acc_ref[...] = jnp.zeros_like(acc_ref)

    # ---- block 1: Linear (no bias), bf16 operands -> f32 accumulation on MXU ----
    h = jnp.dot(x_ref[...], w1_ref[...], preferred_element_type=jnp.float32)  # (B, tk)

    # ---- BatchNorm1d (training mode: per-feature batch stats, biased variance), f32 ----
    mean = jnp.mean(h, axis=0, keepdims=True)                    # (1, tk)
    centered = h - mean
    var = jnp.mean(centered * centered, axis=0, keepdims=True)   # biased var
    hn = centered * jax.lax.rsqrt(var + BN_EPS)
    hn = hn * gamma_ref[...].astype(jnp.float32) + beta_ref[...].astype(jnp.float32)

    # ---- ReLU, then back to matmul dtype for the second MXU pass ----
    a = jnp.maximum(hn, 0.0).astype(w2_ref.dtype)                # (B, tk)

    # ---- block 2: partial Linear, accumulated in f32 scratch ----
    acc_ref[...] += jnp.dot(a, w2_ref[...], preferred_element_type=jnp.float32)

    @pl.when(k == pl.num_programs(1) - 1)
    def _():
        o_ref[...] = (acc_ref[...] + b2_ref[...].astype(jnp.float32)).astype(o_ref.dtype)


def projection_head(x, w1, gamma, beta, w2, b2, *, tk=None, tn=None):
    """x: (B, IN). w1: (IN, HID). gamma/beta: (1, HID). w2: (HID, OUT). b2: (1, OUT).
    Weights are stored pre-transposed (in_features, out_features) == PyTorch weight.T."""
    B, IN = x.shape
    HID = w1.shape[1]
    OUT = w2.shape[1]

    # Pad feature dims to lane-dense multiples of 128. Padding is exact:
    # zero weight columns/rows contribute nothing, padded BN features map 0 -> 0.
    HID_pad = _round_up(HID, 128)
    OUT_pad = _round_up(OUT, 128)

    if tk is None:
        tk = 256 if HID_pad % 256 == 0 else 128
    if tn is None:
        tn = 256 if OUT_pad % 256 == 0 else 128
    tk = min(tk, HID_pad)
    tn = min(tn, OUT_pad)
    assert HID_pad % tk == 0 and OUT_pad % tn == 0

    w1p = jnp.pad(w1, ((0, 0), (0, HID_pad - HID)))
    gammap = jnp.pad(gamma, ((0, 0), (0, HID_pad - HID)), constant_values=1.0)
    betap = jnp.pad(beta, ((0, 0), (0, HID_pad - HID)))
    w2p = jnp.pad(w2, ((0, HID_pad - HID), (0, OUT_pad - OUT)))
    b2p = jnp.pad(b2, ((0, 0), (0, OUT_pad - OUT)))

    n_out = OUT_pad // tn
    n_hid = HID_pad // tk

    xb = x.dtype.itemsize
    wb = w1.dtype.itemsize
    pb = gamma.dtype.itemsize

    # VMEM budget: double-buffered input/output tiles + f32 accumulator.
    est_bytes = (2 * (B * IN * xb + IN * tk * wb + tk * tn * wb
                      + 2 * tk * pb + tn * pb + B * tn * xb)
                 + B * tn * 4)
    vmem_limit = int(min(max(2 * est_bytes, 8 << 20), 48 << 20))

    cost = pl.CostEstimate(
        flops=2 * B * IN * HID_pad * n_out + 2 * B * HID_pad * OUT_pad,
        transcendentals=HID_pad * n_out,  # rsqrt per hidden feature (per out tile)
        bytes_accessed=int(B * IN * xb
                           + n_out * IN * HID_pad * wb
                           + HID_pad * OUT_pad * wb
                           + n_out * 2 * HID_pad * pb
                           + OUT_pad * pb
                           + B * OUT_pad * xb),
    )

    out = pl.pallas_call(
        projection_head_kernel,
        out_shape=jax.ShapeDtypeStruct((B, OUT_pad), x.dtype),
        grid=(n_out, n_hid),
        in_specs=[
            pl.BlockSpec((B, IN), lambda j, k: (0, 0)),     # x: resident across the grid
            pl.BlockSpec((IN, tk), lambda j, k: (0, k)),    # w1 column tile (HID tile)
            pl.BlockSpec((1, tk), lambda j, k: (0, k)),     # gamma tile
            pl.BlockSpec((1, tk), lambda j, k: (0, k)),     # beta tile
            pl.BlockSpec((tk, tn), lambda j, k: (k, j)),    # w2 tile
            pl.BlockSpec((1, tn), lambda j, k: (0, j)),     # b2 tile
        ],
        out_specs=pl.BlockSpec((B, tn), lambda j, k: (0, j)),   # lane-dense (tn % 128 == 0)
        scratch_shapes=[pltpu.VMEM((B, tn), jnp.float32)],      # f32 accumulator
        compiler_params=pltpu.CompilerParams(
            dimension_semantics=("parallel", "arbitrary"),
            vmem_limit_bytes=vmem_limit,
        ),
        cost_estimate=cost,
    )(x, w1p, gammap, betap, w2p, b2p)

    return out[:, :OUT]


def reference_forward(x, w1, gamma, beta, w2, b2):
    """Pure-JAX reference mirroring the kernel's dtype handling."""
    h = jnp.dot(x, w1, preferred_element_type=jnp.float32)
    mean = jnp.mean(h, axis=0, keepdims=True)
    centered = h - mean
    var = jnp.mean(centered * centered, axis=0, keepdims=True)
    hn = centered * jax.lax.rsqrt(var + BN_EPS)
    hn = hn * gamma.astype(jnp.float32) + beta.astype(jnp.float32)
    a = jnp.maximum(hn, 0.0).astype(w2.dtype)
    y = jnp.dot(a, w2, preferred_element_type=jnp.float32) + b2.astype(jnp.float32)
    return y.astype(x.dtype)


if __name__ == "__main__":
    # Small shapes consistent with the module: x is (batch_size, input_dim).
    B, IN, HID, OUT = 8, 32, 32, 16

    key = jax.random.PRNGKey(0)
    k_x, k_w1, k_g, k_b, k_w2, k_b2 = jax.random.split(key, 6)

    # bf16 matmul operands (MXU fast path); f32 BN / bias parameters.
    x = jax.random.normal(k_x, (B, IN), dtype=jnp.float32).astype(jnp.bfloat16)
    w1 = (jax.random.normal(k_w1, (IN, HID), dtype=jnp.float32) * (1.0 / IN ** 0.5)
          ).astype(jnp.bfloat16)
    gamma = 1.0 + 0.1 * jax.random.normal(k_g, (1, HID), dtype=jnp.float32)
    beta = 0.1 * jax.random.normal(k_b, (1, HID), dtype=jnp.float32)
    w2 = (jax.random.normal(k_w2, (HID, OUT), dtype=jnp.float32) * (1.0 / HID ** 0.5)
          ).astype(jnp.bfloat16)
    b2 = 0.1 * jax.random.normal(k_b2, (1, OUT), dtype=jnp.float32)

    y = projection_head(x, w1, gamma, beta, w2, b2)
    jax.block_until_ready(y)

    y_ref = reference_forward(x, w1, gamma, beta, w2, b2)
    assert y.shape == (B, OUT)
    assert jnp.allclose(y.astype(jnp.float32), y_ref.astype(jnp.float32),
                        atol=3e-2, rtol=3e-2), "mismatch vs pure-JAX reference"

    print("KERNEL_OK")
</pallas_src>

<mosaic_0001>
module attributes {stable_mosaic.version = 11 : i64} {
  func.func @projection_head_kernel(%arg0: i32, %arg1: i32, %arg2: memref<8x32xbf16, #tpu.memory_space<vmem>>, %arg3: memref<32x128xbf16, #tpu.memory_space<vmem>>, %arg4: memref<1x128xf32, #tpu.memory_space<vmem>>, %arg5: memref<1x128xf32, #tpu.memory_space<vmem>>, %arg6: memref<128x128xbf16, #tpu.memory_space<vmem>>, %arg7: memref<1x128xf32, #tpu.memory_space<vmem>>, %arg8: memref<8x128xbf16, #tpu.memory_space<vmem>>, %arg9: memref<8x128xf32, #tpu.memory_space<vmem>>) attributes {dimension_semantics = [#tpu.dimension_semantics<parallel>, #tpu.dimension_semantics<arbitrary>], iteration_bounds = array<i64: 1, 1>, scalar_prefetch = 0 : i64, scratch_operands = 1 : i64, tpu.core_type = #tpu.core_type<tc>, window_params = [{pipeline_mode = #tpu.pipeline_mode<synchronous>, transform_indices = @transform_0, window_bounds = array<i64: 8, 32>}, {transform_indices = @transform_1, window_bounds = array<i64: 32, 128>}, {transform_indices = @transform_2, window_bounds = array<i64: 1, 128>}, {transform_indices = @transform_3, window_bounds = array<i64: 1, 128>}, {transform_indices = @transform_4, window_bounds = array<i64: 128, 128>}, {transform_indices = @transform_5, window_bounds = array<i64: 1, 128>}, {transform_indices = @transform_6, window_bounds = array<i64: 8, 128>}]} {
    %c0_i32 = arith.constant 0 : i32
    %0 = arith.cmpi eq, %arg1, %c0_i32 : i32
    %1 = arith.extui %0 : i1 to i32
    %c0_i32_0 = arith.constant 0 : i32
    %2 = arith.cmpi ne, %1, %c0_i32_0 : i32
    scf.if %2 {
      %cst_23 = arith.constant 0.000000e+00 : f32
      %39 = vector.broadcast %cst_23 : f32 to vector<8x128xf32>
      %c0_24 = arith.constant 0 : index
      %c0_25 = arith.constant 0 : index
      %40 = vector.load %arg9[%c0_24, %c0_25] : memref<8x128xf32, #tpu.memory_space<vmem>>, vector<8x128xf32>
      tpu.vector_store %arg9[%c0_24, %c0_25], %39 {strides = array<i32>} : memref<8x128xf32, #tpu.memory_space<vmem>>, vector<8x128xf32>,
    } else {
    }
    %c0 = arith.constant 0 : index
    %c0_1 = arith.constant 0 : index
    %3 = vector.load %arg2[%c0, %c0_1] : memref<8x32xbf16, #tpu.memory_space<vmem>>, vector<8x32xbf16>
    %c0_2 = arith.constant 0 : index
    %c0_3 = arith.constant 0 : index
    %4 = vector.load %arg3[%c0_2, %c0_3] : memref<32x128xbf16, #tpu.memory_space<vmem>>, vector<32x128xbf16>
    %cst = arith.constant dense<0.000000e+00> : vector<8x128xf32>
    %5 = tpu.matmul %3, %4, %cst {dimension_numbers = #tpu.dot_dimension_numbers<[1], [0], [0], [1], [0, 0, 1, 1], [], []>} : vector<8x32xbf16>, vector<32x128xbf16>, vector<8x128xf32> -> vector<8x128xf32>
    %cst_4 = arith.constant dense<0.000000e+00> : vector<128xf32>
    %6 = vector.multi_reduction <add>, %5, %cst_4 [0] : vector<8x128xf32> to vector<128xf32>
    %7 = vector.shape_cast %6 : vector<128xf32> to vector<1x128xf32>
    %cst_5 = arith.constant 8.000000e+00 : f32
    %8 = vector.broadcast %cst_5 : f32 to vector<1x128xf32>
    %9 = arith.divf %7, %8 : vector<1x128xf32>
    %10 = vector.broadcast %9 : vector<1x128xf32> to vector<8x128xf32>
    %11 = arith.subf %5, %10 : vector<8x128xf32>
    %12 = arith.mulf %11, %11 : vector<8x128xf32>
    %cst_6 = arith.constant dense<0.000000e+00> : vector<128xf32>
    %13 = vector.multi_reduction <add>, %12, %cst_6 [0] : vector<8x128xf32> to vector<128xf32>
    %14 = vector.shape_cast %13 : vector<128xf32> to vector<1x128xf32>
    %cst_7 = arith.constant 8.000000e+00 : f32
    %15 = vector.broadcast %cst_7 : f32 to vector<1x128xf32>
    %16 = arith.divf %14, %15 : vector<1x128xf32>
    %cst_8 = arith.constant 9.99999974E-6 : f32
    %17 = vector.broadcast %cst_8 : f32 to vector<1x128xf32>
    %18 = arith.addf %16, %17 : vector<1x128xf32>
    %19 = math.rsqrt %18 : vector<1x128xf32>
    %20 = vector.broadcast %19 : vector<1x128xf32> to vector<8x128xf32>
    %21 = arith.mulf %11, %20 : vector<8x128xf32>
    %c0_9 = arith.constant 0 : index
    %c0_10 = arith.constant 0 : index
    %22 = vector.load %arg4[%c0_9, %c0_10] : memref<1x128xf32, #tpu.memory_space<vmem>>, vector<1x128xf32>
    %23 = vector.broadcast %22 : vector<1x128xf32> to vector<8x128xf32>
    %24 = arith.mulf %21, %23 : vector<8x128xf32>
    %c0_11 = arith.constant 0 : index
    %c0_12 = arith.constant 0 : index
    %25 = vector.load %arg5[%c0_11, %c0_12] : memref<1x128xf32, #tpu.memory_space<vmem>>, vector<1x128xf32>
    %26 = vector.broadcast %25 : vector<1x128xf32> to vector<8x128xf32>
    %27 = arith.addf %24, %26 : vector<8x128xf32>
    %cst_13 = arith.constant 0.000000e+00 : f32
    %28 = vector.broadcast %cst_13 : f32 to vector<8x128xf32>
    %29 = arith.maximumf %27, %28 : vector<8x128xf32>
    %30 = arith.truncf %29 : vector<8x128xf32> to vector<8x128xbf16>
    %c0_14 = arith.constant 0 : index
    %c0_15 = arith.constant 0 : index
    %31 = vector.load %arg9[%c0_14, %c0_15] : memref<8x128xf32, #tpu.memory_space<vmem>>, vector<8x128xf32>
    %c0_16 = arith.constant 0 : index
    %c0_17 = arith.constant 0 : index
    %32 = vector.load %arg6[%c0_16, %c0_17] : memref<128x128xbf16, #tpu.memory_space<vmem>>, vector<128x128xbf16>
    %cst_18 = arith.constant dense<0.000000e+00> : vector<8x128xf32>
    %33 = tpu.matmul %30, %32, %cst_18 {dimension_numbers = #tpu.dot_dimension_numbers<[1], [0], [0], [1], [0, 0, 1, 1], [], []>} : vector<8x128xbf16>, vector<128x128xbf16>, vector<8x128xf32> -> vector<8x128xf32>
    %34 = arith.addf %31, %33 : vector<8x128xf32>
    %c0_19 = arith.constant 0 : index
    %c0_20 = arith.constant 0 : index
    %35 = vector.load %arg9[%c0_19, %c0_20] : memref<8x128xf32, #tpu.memory_space<vmem>>, vector<8x128xf32>
    tpu.vector_store %arg9[%c0_19, %c0_20], %34 {strides = array<i32>} : memref<8x128xf32, #tpu.memory_space<vmem>>, vector<8x128xf32>,
    %c0_i32_21 = arith.constant 0 : i32
    %36 = arith.cmpi eq, %arg1, %c0_i32_21 : i32
    %37 = arith.extui %36 : i1 to i32
    %c0_i32_22 = arith.constant 0 : i32
    %38 = arith.cmpi ne, %37, %c0_i32_22 : i32
    scf.if %38 {
      %c0_23 = arith.constant 0 : index
      %c0_24 = arith.constant 0 : index
      %39 = vector.load %arg9[%c0_23, %c0_24] : memref<8x128xf32, #tpu.memory_space<vmem>>, vector<8x128xf32>
      %c0_25 = arith.constant 0 : index
      %c0_26 = arith.constant 0 : index
      %40 = vector.load %arg7[%c0_25, %c0_26] : memref<1x128xf32, #tpu.memory_space<vmem>>, vector<1x128xf32>
      %41 = vector.broadcast %40 : vector<1x128xf32> to vector<8x128xf32>
      %42 = arith.addf %39, %41 : vector<8x128xf32>
      %43 = arith.truncf %42 : vector<8x128xf32> to vector<8x128xbf16>
      %c0_27 = arith.constant 0 : index
      %c0_28 = arith.constant 0 : index
      %44 = vector.load %arg8[%c0_27, %c0_28] : memref<8x128xbf16, #tpu.memory_space<vmem>>, vector<8x128xbf16>
      tpu.vector_store %arg8[%c0_27, %c0_28], %43 {strides = array<i32>} : memref<8x128xbf16, #tpu.memory_space<vmem>>, vector<8x128xbf16>,
    } else {
    }
    return
  }
  func.func @transform_0(%arg0: i32, %arg1: i32) -> (i32, i32) {
    %c0_i32 = arith.constant 0 : i32
    %c0_i32_0 = arith.constant 0 : i32
    %c0_i32_1 = arith.constant 0 : i32
    return %c0_i32, %c0_i32_0 : i32, i32
  }
  func.func @transform_1(%arg0: i32, %arg1: i32) -> (i32, i32) {
    %c0_i32 = arith.constant 0 : i32
    %c0_i32_0 = arith.constant 0 : i32
    return %c0_i32, %arg1 : i32, i32
  }
  func.func @transform_2(%arg0: i32, %arg1: i32) -> (i32, i32) {
    %c0_i32 = arith.constant 0 : i32
    %c0_i32_0 = arith.constant 0 : i32
    return %c0_i32, %arg1 : i32, i32
  }
  func.func @transform_3(%arg0: i32, %arg1: i32) -> (i32, i32) {
    %c0_i32 = arith.constant 0 : i32
    %c0_i32_0 = arith.constant 0 : i32
    return %c0_i32, %arg1 : i32, i32
  }
  func.func @transform_4(%arg0: i32, %arg1: i32) -> (i32, i32) {
    %c0_i32 = arith.constant 0 : i32
    return %arg1, %arg0 : i32, i32
  }
  func.func @transform_5(%arg0: i32, %arg1: i32) -> (i32, i32) {
    %c0_i32 = arith.constant 0 : i32
    %c0_i32_0 = arith.constant 0 : i32
    return %c0_i32, %arg0 : i32, i32
  }
  func.func @transform_6(%arg0: i32, %arg1: i32) -> (i32, i32) {
    %c0_i32 = arith.constant 0 : i32
    %c0_i32_0 = arith.constant 0 : i32
    return %c0_i32, %arg0 : i32, i32
  }
}

</mosaic_0001>

<llo_original>
// kernel: tpu_custom_call.1
$region0: #{tpu_custom_call.1}
  #allocation0 [shape = 'u32[]', space=smem, size = 0x4, offset = 0x4, fixed_abs, tag = 'smem constant byte address 0x4 - core index']
  #allocation1 [shape = 'u32[144,128]{1,0:T(1,128)}', space=vmem, size = 0x12000, scoped, tag = 'internal scratch']
  #allocation2 [shape = 'f32[8,128]{1,0:T(8,128)}', space=vmem, size = 0x1000, scoped, tag = 'scratch operand']
  %s0 = inlined_call_operand.hbm [shape: bf16[8,32], index: 0, kind: input, shape index: {}]
  %s1 = inlined_call_operand.hbm [shape: bf16[32,128], index: 1, kind: input, shape index: {}]
  %s2 = inlined_call_operand.vmem [shape: f32[1,128], index: 2, kind: input, shape index: {}]
  %s3 = inlined_call_operand.vmem [shape: f32[1,128], index: 3, kind: input, shape index: {}]
  %s4 = inlined_call_operand.hbm [shape: bf16[128,128], index: 4, kind: input, shape index: {}]
  %s5 = inlined_call_operand.vmem [shape: f32[1,128], index: 5, kind: input, shape index: {}]
  %s6 = inlined_call_operand.hbm [shape: bf16[8,128], index: 6, kind: output, shape index: {}]
  %s7 = sld [smem:[#allocation0]]
  $region54: #{tpu_custom_call.1} parent=0
    _
  %s9 = ssub.s32 1, %s7
  %s10 = scalar_select 0, %s9, %s7
  $region1: #{tpu_custom_call.1} parent=0
    #allocation3 [shape = 'u8[2048]{0}', space=vmem, size = 0x800, scoped, tag = 'input window, operand 0, single buffered']
    #allocation4 [shape = 's32[1]{0}', space=sflag, size = 0x4, scoped, tag = 'scoped memory for tpu_custom_call.1']
    #allocation5 [shape = 's32[1]{0}', space=sflag, size = 0x4, scoped, tag = 'scoped memory for tpu_custom_call.1']
    #allocation6 [shape = 'u8[8192]{0}', space=vmem, size = 0x2000, scoped, tag = 'input window, operand 1, single buffered']
    #allocation7 [shape = 's32[1]{0}', space=sflag, size = 0x4, scoped, tag = 'scoped memory for tpu_custom_call.1']
    #allocation8 [shape = 'u8[32768]{0}', space=vmem, size = 0x8000, scoped, tag = 'input window, operand 4, single buffered']
    #allocation9 [shape = 'u8[2048]{0}', space=vmem, size = 0x800, scoped, tag = 'output window, operand 0, single buffered']
    %11 = vsyncpa [#allocation4], 0
    %12 = vsyncpa [#allocation7], 0
    %13 = vsyncpa [#allocation5], 0
    // Predicated region
    $region2: #{tpu_custom_call.1} parent=1 // pred_check
      _
    $region3: #{tpu_custom_call.1} parent=1 // pred_check_branch
      %15 = sbr.rel (0) target = $region5
    $region4: #{tpu_custom_call.1} parent=1 // pred_region
      %s17 = ssub.s32 64, 64
      %18 = vsyncadd [#allocation4], %s17
      %s20 = sshll.u32 [#allocation3], 4
      %s21 = int_to_ptr.vmem [resolvable:$true] %s20
      %23 = dma.hbm_to_vmem [thread:$0]  %s0, 64, %s21, [#allocation4]
    $region5: #{tpu_custom_call.1} parent=1 // pred_fallthru
      _
    // Predicated region
    $region6: #{tpu_custom_call.1} parent=1 // pred_check
      _
    $region7: #{tpu_custom_call.1} parent=1 // pred_check_branch
      %25 = sbr.rel (0) target = $region9
    $region8: #{tpu_custom_call.1} parent=1 // pred_region
      %s27 = ssub.s32 256, 256
      %28 = vsyncadd [#allocation7], %s27
      %s29 = sshll.u32 [#allocation6], 4
      %s30 = int_to_ptr.vmem [resolvable:$true] %s29
      %35 = dma.hbm_to_vmem [thread:$0]  %s1, 256, %s30, [#allocation7], 64, 64, 4
    $region9: #{tpu_custom_call.1} parent=1 // pred_fallthru
      _
    // Predicated region
    $region10: #{tpu_custom_call.1} parent=1 // pred_check
      _
    $region11: #{tpu_custom_call.1} parent=1 // pred_check_branch
      %37 = sbr.rel (0) target = $region13
    $region12: #{tpu_custom_call.1} parent=1 // pred_region
      _
    $region13: #{tpu_custom_call.1} parent=1 // pred_fallthru
      _
    // Predicated region
    $region14: #{tpu_custom_call.1} parent=1 // pred_check
      _
    $region15: #{tpu_custom_call.1} parent=1 // pred_check_branch
      %39 = sbr.rel (0) target = $region17
    $region16: #{tpu_custom_call.1} parent=1 // pred_region
      _
    $region17: #{tpu_custom_call.1} parent=1 // pred_fallthru
      _
    // Predicated region
    $region18: #{tpu_custom_call.1} parent=1 // pred_check
      _
    $region19: #{tpu_custom_call.1} parent=1 // pred_check_branch
      %41 = sbr.rel (0) target = $region21
    $region20: #{tpu_custom_call.1} parent=1 // pred_region
      %s43 = ssub.s32 1024, 1024
      %44 = vsyncadd [#allocation7], %s43
      %s45 = sshll.u32 [#allocation8], 4
      %s46 = int_to_ptr.vmem [resolvable:$true] %s45
      %51 = dma.hbm_to_vmem [thread:$0]  %s4, 1024, %s46, [#allocation7], 64, 64, 4
    $region21: #{tpu_custom_call.1} parent=1 // pred_fallthru
      _
    // Predicated region
    $region22: #{tpu_custom_call.1} parent=1 // pred_check
      _
    $region23: #{tpu_custom_call.1} parent=1 // pred_check_branch
      %53 = sbr.rel (0) target = $region25
    $region24: #{tpu_custom_call.1} parent=1 // pred_region
      _
    $region25: #{tpu_custom_call.1} parent=1 // pred_fallthru
      _
    // Predicated region
    $region26: #{tpu_custom_call.1} parent=1 // pred_check
      _
    $region27: #{tpu_custom_call.1} parent=1 // pred_check_branch
      %55 = sbr.rel (0) target = $region29
    $region28: #{tpu_custom_call.1} parent=1 // pred_region
      %56 = dma.done [#allocation4], 64
    $region29: #{tpu_custom_call.1} parent=1 // pred_fallthru
      _
    // Predicated region
    $region30: #{tpu_custom_call.1} parent=1 // pred_check
      _
    $region31: #{tpu_custom_call.1} parent=1 // pred_check_branch
      %58 = sbr.rel (0) target = $region33
    $region32: #{tpu_custom_call.1} parent=1 // pred_region
      %59 = dma.done [#allocation7], 256
    $region33: #{tpu_custom_call.1} parent=1 // pred_fallthru
      _
    // Predicated region
    $region34: #{tpu_custom_call.1} parent=1 // pred_check
      _
    $region35: #{tpu_custom_call.1} parent=1 // pred_check_branch
      %61 = sbr.rel (0) target = $region37
    $region36: #{tpu_custom_call.1} parent=1 // pred_region
      %62 = dma.done [#allocation7], 1024
    $region37: #{tpu_custom_call.1} parent=1 // pred_fallthru
      _
    %p64 = scmp.eq.s32.totalorder 0, 0
    // Predicated region
    $region38: #{tpu_custom_call.1} parent=1 // pred_check
      %p65 = pneg %p64
    $region39: #{tpu_custom_call.1} parent=1 // pred_check_branch
      %67 = sbr.rel (%p65) target = $region41
    $region40: #{tpu_custom_call.1} parent=1 // pred_region
      %68 = vst [vmem:[#allocation2] sm:$0xff] 0.0
    $region41: #{tpu_custom_call.1} parent=1 // pred_fallthru
      _
    %v69 = vld [vmem:[#allocation3] sm:$0xf]
    %v70 = vld [vmem:[#allocation6] sm:$0xf]
    %v71 = vld [vmem:[#allocation6 + $0x4] sm:$0xf]
    %v72 = vld [vmem:[#allocation6 + $0x8] sm:$0xf]
    %v73 = vld [vmem:[#allocation6 + $0xc] sm:$0xf]
    %v78 = vunpack.c.l.b16 %v70
    %v79 = vunpack.c.l.b16 %v71
    %v80 = vunpack.c.l.b16 %v72
    %v81 = vunpack.c.l.b16 %v73
    %v82 = vpack.c.b16 %v79, %v78
    %v83 = vpack.c.b16 %v81, %v80
    %vm86 = vcmask 261120
    %v88 = vsel %vm86, %v69, 0
    %90 = vmatprep.subr.bf16.mxu0 0
    %91 = vmatpush1.bf16.msra.mxu0 %v82
    %92 = vmatprep.subr.bf16.mxu0 0
    %93 = vmatpush1.bf16.msra.mxu0 %v83
    %94 = vmatprep.subr.bf16.mxu0 0
    %95 = vmatpush1.bf16.msra.mxu0 0
    %96 = vmatprep.subr.bf16.mxu0 0
    %97 = vmatpush1.bf16.msra.mxu0 0
    %98 = vmatprep.subr.bf16.mxu0 0
    %99 = vmatpush1.bf16.msra.mxu0 0
    %100 = vmatprep.subr.bf16.mxu0 0
    %101 = vmatpush1.bf16.msra.mxu0 0
    %102 = vmatprep.subr.bf16.mxu0 0
    %103 = vmatpush1.bf16.msra.mxu0 0
    %104 = vmatprep.subr.bf16.mxu0 0
    %105 = vmatpush1.bf16.msra.mxu0 0
    %106 = vmatprep.subr.bf16.mxu0 0
    %107 = vmatpush1.bf16.msra.mxu0 0
    %108 = vmatprep.subr.bf16.mxu0 0
    %109 = vmatpush1.bf16.msra.mxu0 0
    %110 = vmatprep.subr.bf16.mxu0 0
    %111 = vmatpush1.bf16.msra.mxu0 0
    %112 = vmatprep.subr.bf16.mxu0 0
    %113 = vmatpush1.bf16.msra.mxu0 0
    %114 = vmatprep.subr.bf16.mxu0 0
    %115 = vmatpush1.bf16.msra.mxu0 0
    %116 = vmatprep.subr.bf16.mxu0 0
    %117 = vmatpush1.bf16.msra.mxu0 0
    %118 = vmatprep.subr.bf16.mxu0 0
    %119 = vmatpush1.bf16.msra.mxu0 0
    %120 = vmatprep.subr.bf16.mxu0 0
    %121 = vmatpush1.bf16.msra.mxu0 0
    %122 = vmatprep.mubr.bf16.mxu0 0
    %123 = vmatmul.mubr.bf16.gmra.mrb[0].mxu0 %v88
    %v124 = vpop.f32.mrb[0].mxu0
    %v125 = vadd.f32 0.0, %v124
    %v126 = vpop.f32.mrb[0].mxu0
    %v127 = vpop.f32.mrb[0].mxu0
    %v128 = vpop.f32.mrb[0].mxu0
    %129 = vdwg.mxu0
    %v130 = vrot.slane %v125, 4
    %v131 = vadd.f32 %v125, %v130
    %v132 = vrot.slane %v131, 2
    %v133 = vadd.f32 %v131, %v132
    %v134 = vrot.slane %v133, 1
    %v135 = vadd.f32 %v133, %v134
    %v136 = vrcp.pop 8.0
    %v137 = vmul.f32 %v135, %v136
    %v138 = vsub.f32 %v125, %v137
    %v139 = vmul.f32 %v138, %v138
    %v140 = vrot.slane %v139, 4
    %v141 = vadd.f32 %v139, %v140
    %v142 = vrot.slane %v141, 2
    %v143 = vadd.f32 %v141, %v142
    %v144 = vrot.slane %v143, 1
    %v145 = vadd.f32 %v143, %v144
    %v146 = vmul.f32 %v145, %v136
    %v147 = vadd.f32 %v146, 1e-05
    %v148 = vrsqrt.pop %v147
    %v149 = vmul.f32 %v138, %v148
    %v150 = vld [vmem:[%s2] sm:$0x1]
    %v152 = vlaneseq
    %v153 = vshrl.u32 %v152, 7
    %v154 = vsub.s32 0, %v153
    %v155 = vrot.slane %v150, %v154
    %v157 = vmul.f32 %v149, %v155
    %v158 = vld [vmem:[%s3] sm:$0x1]
    %v160 = vlaneseq
    %v161 = vshrl.u32 %v160, 7
    %v162 = vsub.s32 0, %v161
    %v163 = vrot.slane %v158, %v162
    %v165 = vadd.f32 %v157, %v163
    %v166 = vmax.f32 %v165, 0.0
    %v167 = vpack.c.bf16 %v166, %v166
    %v168 = vld [vmem:[#allocation2] sm:$0xff]
    %v169 = vld [vmem:[#allocation8] sm:$0xf]
    %v170 = vld [vmem:[#allocation8 + $0x4] sm:$0xf]
    %v171 = vld [vmem:[#allocation8 + $0x8] sm:$0xf]
    %v172 = vld [vmem:[#allocation8 + $0xc] sm:$0xf]
    %v173 = vld [vmem:[#allocation8 + $0x10] sm:$0xf]
    %v174 = vld [vmem:[#allocation8 + $0x14] sm:$0xf]
    %v175 = vld [vmem:[#allocation8 + $0x18] sm:$0xf]
    %v176 = vld [vmem:[#allocation8 + $0x1c] sm:$0xf]
    %v177 = vld [vmem:[#allocation8 + $0x20] sm:$0xf]
    %v178 = vld [vmem:[#allocation8 + $0x24] sm:$0xf]
    %v179 = vld [vmem:[#allocation8 + $0x28] sm:$0xf]
    %v180 = vld [vmem:[#allocation8 + $0x2c] sm:$0xf]
    %v181 = vld [vmem:[#allocation8 + $0x30] sm:$0xf]
    %v182 = vld [vmem:[#allocation8 + $0x34] sm:$0xf]
    %v183 = vld [vmem:[#allocation8 + $0x38] sm:$0xf]
    %v184 = vld [vmem:[#allocation8 + $0x3c] sm:$0xf]
    %v201 = vunpack.c.l.b16 %v169
    %v202 = vunpack.c.l.b16 %v170
    %v203 = vunpack.c.l.b16 %v171
    %v204 = vunpack.c.l.b16 %v172
    %v205 = vunpack.c.l.b16 %v173
    %v206 = vunpack.c.l.b16 %v174
    %v207 = vunpack.c.l.b16 %v175
    %v208 = vunpack.c.l.b16 %v176
    %v209 = vunpack.c.l.b16 %v177
    %v210 = vunpack.c.l.b16 %v178
    %v211 = vunpack.c.l.b16 %v179
    %v212 = vunpack.c.l.b16 %v180
    %v213 = vunpack.c.l.b16 %v181
    %v214 = vunpack.c.l.b16 %v182
    %v215 = vunpack.c.l.b16 %v183
    %v216 = vunpack.c.l.b16 %v184
    %v217 = vpack.c.b16 %v202, %v201
    %v218 = vpack.c.b16 %v204, %v203
    %v219 = vpack.c.b16 %v206, %v205
    %v220 = vpack.c.b16 %v208, %v207
    %v221 = vpack.c.b16 %v210, %v209
    %v222 = vpack.c.b16 %v212, %v211
    %v223 = vpack.c.b16 %v214, %v213
    %v224 = vpack.c.b16 %v216, %v215
    %233 = vmatprep.subr.bf16.mxu0 0
    %234 = vmatpush1.bf16.msra.mxu0 %v217
    %235 = vmatprep.subr.bf16.mxu0 0
    %236 = vmatpush1.bf16.msra.mxu0 %v218
    %237 = vmatprep.subr.bf16.mxu0 0
    %238 = vmatpush1.bf16.msra.mxu0 %v219
    %239 = vmatprep.subr.bf16.mxu0 0
    %240 = vmatpush1.bf16.msra.mxu0 %v220
    %241 = vmatprep.subr.bf16.mxu0 0
    %242 = vmatpush1.bf16.msra.mxu0 %v221
    %243 = vmatprep.subr.bf16.mxu0 0
    %244 = vmatpush1.bf16.msra.mxu0 %v222
    %245 = vmatprep.subr.bf16.mxu0 0
    %246 = vmatpush1.bf16.msra.mxu0 %v223
    %247 = vmatprep.subr.bf16.mxu0 0
    %248 = vmatpush1.bf16.msra.mxu0 %v224
    %249 = vmatprep.subr.bf16.mxu0 0
    %250 = vmatpush1.bf16.msra.mxu0 0
    %251 = vmatprep.subr.bf16.mxu0 0
    %252 = vmatpush1.bf16.msra.mxu0 0
    %253 = vmatprep.subr.bf16.mxu0 0
    %254 = vmatpush1.bf16.msra.mxu0 0
    %255 = vmatprep.subr.bf16.mxu0 0
    %256 = vmatpush1.bf16.msra.mxu0 0
    %257 = vmatprep.subr.bf16.mxu0 0
    %258 = vmatpush1.bf16.msra.mxu0 0
    %259 = vmatprep.subr.bf16.mxu0 0
    %260 = vmatpush1.bf16.msra.mxu0 0
    %261 = vmatprep.subr.bf16.mxu0 0
    %262 = vmatpush1.bf16.msra.mxu0 0
    %263 = vmatprep.subr.bf16.mxu0 0
    %264 = vmatpush1.bf16.msra.mxu0 0
    %265 = vmatprep.mubr.bf16.mxu0 0
    %266 = vmatmul.mubr.bf16.gmra.mrb[0].mxu0 %v167
    %v267 = vpop.f32.mrb[0].mxu0
    %v268 = vadd.f32 0.0, %v267
    %v269 = vpop.f32.mrb[0].mxu0
    %v270 = vpop.f32.mrb[0].mxu0
    %v271 = vpop.f32.mrb[0].mxu0
    %272 = vdwg.mxu0
    %v273 = vadd.f32 %v168, %v268
    %274 = vst [vmem:[#allocation2] sm:$0xff] %v273
    // Predicated region
    $region42: #{tpu_custom_call.1} parent=1 // pred_check
      %p275 = pneg %p64
    $region43: #{tpu_custom_call.1} parent=1 // pred_check_branch
      %277 = sbr.rel (%p275) target = $region45
    $region44: #{tpu_custom_call.1} parent=1 // pred_region
      %v278 = vld [vmem:[#allocation2] sm:$0xff]
      %v279 = vld [vmem:[%s5] sm:$0x1]
      %v281 = vlaneseq
      %v282 = vshrl.u32 %v281, 7
      %v283 = vsub.s32 0, %v282
      %v284 = vrot.slane %v279, %v283
      %v286 = vadd.f32 %v278, %v284
      %v287 = vpack.c.bf16 %v286, %v286
      %288 = vst [vmem:[#allocation9] sm:$0xf] %v287
    $region45: #{tpu_custom_call.1} parent=1 // pred_fallthru
      _
    // Predicated region
    $region46: #{tpu_custom_call.1} parent=1 // pred_check
      _
    $region47: #{tpu_custom_call.1} parent=1 // pred_check_branch
      %290 = sbr.rel (0) target = $region49
    $region48: #{tpu_custom_call.1} parent=1 // pred_region
      %s292 = ssub.s32 64, 64
      %293 = vsyncadd [#allocation5], %s292
      %s295 = sshll.u32 [#allocation9], 4
      %s296 = int_to_ptr.vmem [resolvable:$true] %s295
      %298 = dma.vmem_to_hbm [thread:$0]  %s296, 64, %s6, [#allocation5]
    $region49: #{tpu_custom_call.1} parent=1 // pred_fallthru
      _
    // Predicated region
    $region50: #{tpu_custom_call.1} parent=1 // pred_check
      _
    $region51: #{tpu_custom_call.1} parent=1 // pred_check_branch
      %300 = sbr.rel (0) target = $region53
    $region52: #{tpu_custom_call.1} parent=1 // pred_region
      %301 = dma.done [#allocation5], 64
    $region53: #{tpu_custom_call.1} parent=1 // pred_fallthru
      _
    %302 = vsyncpa [#allocation4], 1
    %303 = vsyncpa [#allocation7], 1
    %304 = vsyncpa [#allocation5], 1

</llo_original>
